<compile_context>
chip_gen: v5e
topology: v5e:2x2
jax: 0.10.0
libtpu: 0.0.40
codegen_flags: <defaults>
</compile_context>

<pallas_src>
import functools

import jax
import jax.numpy as jnp
from jax.experimental import pallas as pl
from jax.experimental.pallas import tpu as pltpu

N_OUT_PAD = 128   # lane-dense padded output width
TB_MAX = 128      # max batch tile (fills MXU M on all generations)


def mlp_kernel(x_ref,
               w1_ref, b1_ref,
               w2_ref, b2_ref,
               w3_ref, b3_ref,
               w4_ref, b4_ref,
               o_ref):
    # hidden1 + ReLU  (bf16 operands -> f32 accumulation on the MXU)
    h = jnp.dot(x_ref[...].astype(jnp.bfloat16), w1_ref[...],
                preferred_element_type=jnp.float32)
    h = jnp.maximum(h + b1_ref[...], 0.0)
    # hidden2 + ReLU
    h = jnp.dot(h.astype(jnp.bfloat16), w2_ref[...],
                preferred_element_type=jnp.float32)
    h = jnp.maximum(h + b2_ref[...], 0.0)
    # hidden3 + ReLU
    h = jnp.dot(h.astype(jnp.bfloat16), w3_ref[...],
                preferred_element_type=jnp.float32)
    h = jnp.maximum(h + b3_ref[...], 0.0)
    # predict (no activation) -> lane-dense padded (TB, 128) store
    h = jnp.dot(h.astype(jnp.bfloat16), w4_ref[...],
                preferred_element_type=jnp.float32)
    o_ref[...] = (h + b4_ref[...]).astype(o_ref.dtype)


def prepare_params(params):
    """One-time prep (call once, reuse across forwards):
    transpose weights to (in, out), cast to bf16, zero-pad the last layer's
    output dim to N_OUT_PAD, keep biases in f32 as (1, out)."""
    prepped = []
    for i in range(1, 5):
        w = jnp.transpose(params[f"w{i}"])          # (in, out)
        b = params[f"b{i}"].reshape(1, -1)          # (1, out)
        if i == 4:
            out_f = w.shape[1]
            pad = N_OUT_PAD - out_f
            w = jnp.pad(w, ((0, 0), (0, pad)))      # zero cols -> no lane leak
            b = jnp.pad(b, ((0, 0), (0, pad)))
        prepped.append(w.astype(jnp.bfloat16))
        prepped.append(b.astype(jnp.float32))
    return tuple(prepped)


@functools.partial(jax.jit, static_argnames=("n_output",))
def mlp_forward(x, prepped, n_output):
    """x: (B, n_input) float32. prepped: output of prepare_params."""
    B, n_input = x.shape

    # Adaptive batch tile: round small batches to a sublane multiple (8),
    # use full 128-row MXU tiles for large batches.
    if B <= TB_MAX:
        tb = max(8, pl.cdiv(B, 8) * 8)
        b_pad = tb
    else:
        tb = TB_MAX
        b_pad = pl.cdiv(B, TB_MAX) * TB_MAX
    if b_pad != B:
        x = jnp.pad(x, ((0, b_pad - B), (0, 0)))
    grid = (b_pad // tb,)

    # Batch-tiled x/out specs; weights & biases resident (constant index_map).
    def resident(shape):
        return pl.BlockSpec(shape, lambda i: (0, 0))

    in_specs = [pl.BlockSpec((tb, n_input), lambda i: (i, 0))]
    for j in range(0, 8, 2):
        in_specs.append(resident(prepped[j].shape))      # weight (in, out)
        in_specs.append(resident(prepped[j + 1].shape))  # bias   (1, out)

    out = pl.pallas_call(
        mlp_kernel,
        grid=grid,
        out_shape=jax.ShapeDtypeStruct((b_pad, N_OUT_PAD), jnp.float32),
        in_specs=in_specs,
        out_specs=pl.BlockSpec((tb, N_OUT_PAD), lambda i: (i, 0)),
        compiler_params=pltpu.CompilerParams(
            dimension_semantics=("parallel",)),
    )(x, *prepped)

    return out[:B, :n_output]


def init_params(key, n_input, n_output):
    """Deterministic init matching the PyTorch module's layer shapes
    (PyTorch convention: w_i is (out, in), b_i is (out,))."""
    dims = [(512, n_input), (256, 512), (128, 256), (n_output, 128)]
    params = {}
    for i, (out_f, in_f) in enumerate(dims, start=1):
        key, kw, kb = jax.random.split(key, 3)
        bound = 1.0 / jnp.sqrt(in_f)
        params[f"w{i}"] = jax.random.uniform(
            kw, (out_f, in_f), jnp.float32, -bound, bound)
        params[f"b{i}"] = jax.random.uniform(
            kb, (out_f,), jnp.float32, -bound, bound)
    return params


def mlp_reference(x, params):
    h = x
    for i in range(1, 4):
        h = jnp.maximum(h @ params[f"w{i}"].T + params[f"b{i}"], 0.0)
    return h @ params["w4"].T + params["b4"]


if __name__ == "__main__":
    key = jax.random.PRNGKey(0)
    n_input, n_output, batch = 64, 10, 8

    kx, kp = jax.random.split(key)
    x = jax.random.normal(kx, (batch, n_input), jnp.float32)
    params = init_params(kp, n_input, n_output)

    prepped = prepare_params(params)           # one-time weight prep
    out = mlp_forward(x, prepped, n_output)
    out = jax.block_until_ready(out)

    ref = mlp_reference(x, params)             # f32 reference
    assert out.shape == (batch, n_output), f"bad shape {out.shape}"
    # bf16 MXU operands (f32 accumulation) -> loosened tolerance vs f32 ref.
    assert jnp.allclose(out, ref, atol=1e-1, rtol=1e-1), "mismatch vs reference"

    print("KERNEL_OK")
</pallas_src>

<mosaic_0001>
module attributes {stable_mosaic.version = 11 : i64} {
  func.func @mlp_kernel(%arg0: i32, %arg1: memref<8x64xf32, #tpu.memory_space<vmem>>, %arg2: memref<64x512xbf16, #tpu.memory_space<vmem>>, %arg3: memref<1x512xf32, #tpu.memory_space<vmem>>, %arg4: memref<512x256xbf16, #tpu.memory_space<vmem>>, %arg5: memref<1x256xf32, #tpu.memory_space<vmem>>, %arg6: memref<256x128xbf16, #tpu.memory_space<vmem>>, %arg7: memref<1x128xf32, #tpu.memory_space<vmem>>, %arg8: memref<128x128xbf16, #tpu.memory_space<vmem>>, %arg9: memref<1x128xf32, #tpu.memory_space<vmem>>, %arg10: memref<8x128xf32, #tpu.memory_space<vmem>>) attributes {dimension_semantics = [#tpu.dimension_semantics<parallel>], iteration_bounds = array<i64: 1>, scalar_prefetch = 0 : i64, scratch_operands = 0 : i64, tpu.core_type = #tpu.core_type<tc>, window_params = [{transform_indices = @transform_0, window_bounds = array<i64: 8, 64>}, {pipeline_mode = #tpu.pipeline_mode<synchronous>, transform_indices = @transform_1, window_bounds = array<i64: 64, 512>}, {pipeline_mode = #tpu.pipeline_mode<synchronous>, transform_indices = @transform_2, window_bounds = array<i64: 1, 512>}, {pipeline_mode = #tpu.pipeline_mode<synchronous>, transform_indices = @transform_3, window_bounds = array<i64: 512, 256>}, {pipeline_mode = #tpu.pipeline_mode<synchronous>, transform_indices = @transform_4, window_bounds = array<i64: 1, 256>}, {pipeline_mode = #tpu.pipeline_mode<synchronous>, transform_indices = @transform_5, window_bounds = array<i64: 256, 128>}, {pipeline_mode = #tpu.pipeline_mode<synchronous>, transform_indices = @transform_6, window_bounds = array<i64: 1, 128>}, {pipeline_mode = #tpu.pipeline_mode<synchronous>, transform_indices = @transform_7, window_bounds = array<i64: 128, 128>}, {pipeline_mode = #tpu.pipeline_mode<synchronous>, transform_indices = @transform_8, window_bounds = array<i64: 1, 128>}, {transform_indices = @transform_9, window_bounds = array<i64: 8, 128>}]} {
    %c0 = arith.constant 0 : index
    %c0_0 = arith.constant 0 : index
    %0 = vector.load %arg1[%c0, %c0_0] : memref<8x64xf32, #tpu.memory_space<vmem>>, vector<8x64xf32>
    %1 = arith.truncf %0 : vector<8x64xf32> to vector<8x64xbf16>
    %c0_1 = arith.constant 0 : index
    %c0_2 = arith.constant 0 : index
    %2 = vector.load %arg2[%c0_1, %c0_2] : memref<64x512xbf16, #tpu.memory_space<vmem>>, vector<64x512xbf16>
    %cst = arith.constant dense<0.000000e+00> : vector<8x512xf32>
    %3 = tpu.matmul %1, %2, %cst {dimension_numbers = #tpu.dot_dimension_numbers<[1], [0], [0], [1], [0, 0, 1, 1], [], []>} : vector<8x64xbf16>, vector<64x512xbf16>, vector<8x512xf32> -> vector<8x512xf32>
    %c0_3 = arith.constant 0 : index
    %c0_4 = arith.constant 0 : index
    %4 = vector.load %arg3[%c0_3, %c0_4] : memref<1x512xf32, #tpu.memory_space<vmem>>, vector<1x512xf32>
    %5 = vector.broadcast %4 : vector<1x512xf32> to vector<8x512xf32>
    %6 = arith.addf %3, %5 : vector<8x512xf32>
    %cst_5 = arith.constant 0.000000e+00 : f32
    %7 = vector.broadcast %cst_5 : f32 to vector<8x512xf32>
    %8 = arith.maximumf %6, %7 : vector<8x512xf32>
    %9 = arith.truncf %8 : vector<8x512xf32> to vector<8x512xbf16>
    %c0_6 = arith.constant 0 : index
    %c0_7 = arith.constant 0 : index
    %10 = vector.load %arg4[%c0_6, %c0_7] : memref<512x256xbf16, #tpu.memory_space<vmem>>, vector<512x256xbf16>
    %cst_8 = arith.constant dense<0.000000e+00> : vector<8x256xf32>
    %11 = tpu.matmul %9, %10, %cst_8 {dimension_numbers = #tpu.dot_dimension_numbers<[1], [0], [0], [1], [0, 0, 1, 1], [], []>} : vector<8x512xbf16>, vector<512x256xbf16>, vector<8x256xf32> -> vector<8x256xf32>
    %c0_9 = arith.constant 0 : index
    %c0_10 = arith.constant 0 : index
    %12 = vector.load %arg5[%c0_9, %c0_10] : memref<1x256xf32, #tpu.memory_space<vmem>>, vector<1x256xf32>
    %13 = vector.broadcast %12 : vector<1x256xf32> to vector<8x256xf32>
    %14 = arith.addf %11, %13 : vector<8x256xf32>
    %cst_11 = arith.constant 0.000000e+00 : f32
    %15 = vector.broadcast %cst_11 : f32 to vector<8x256xf32>
    %16 = arith.maximumf %14, %15 : vector<8x256xf32>
    %17 = arith.truncf %16 : vector<8x256xf32> to vector<8x256xbf16>
    %c0_12 = arith.constant 0 : index
    %c0_13 = arith.constant 0 : index
    %18 = vector.load %arg6[%c0_12, %c0_13] : memref<256x128xbf16, #tpu.memory_space<vmem>>, vector<256x128xbf16>
    %cst_14 = arith.constant dense<0.000000e+00> : vector<8x128xf32>
    %19 = tpu.matmul %17, %18, %cst_14 {dimension_numbers = #tpu.dot_dimension_numbers<[1], [0], [0], [1], [0, 0, 1, 1], [], []>} : vector<8x256xbf16>, vector<256x128xbf16>, vector<8x128xf32> -> vector<8x128xf32>
    %c0_15 = arith.constant 0 : index
    %c0_16 = arith.constant 0 : index
    %20 = vector.load %arg7[%c0_15, %c0_16] : memref<1x128xf32, #tpu.memory_space<vmem>>, vector<1x128xf32>
    %21 = vector.broadcast %20 : vector<1x128xf32> to vector<8x128xf32>
    %22 = arith.addf %19, %21 : vector<8x128xf32>
    %cst_17 = arith.constant 0.000000e+00 : f32
    %23 = vector.broadcast %cst_17 : f32 to vector<8x128xf32>
    %24 = arith.maximumf %22, %23 : vector<8x128xf32>
    %25 = arith.truncf %24 : vector<8x128xf32> to vector<8x128xbf16>
    %c0_18 = arith.constant 0 : index
    %c0_19 = arith.constant 0 : index
    %26 = vector.load %arg8[%c0_18, %c0_19] : memref<128x128xbf16, #tpu.memory_space<vmem>>, vector<128x128xbf16>
    %cst_20 = arith.constant dense<0.000000e+00> : vector<8x128xf32>
    %27 = tpu.matmul %25, %26, %cst_20 {dimension_numbers = #tpu.dot_dimension_numbers<[1], [0], [0], [1], [0, 0, 1, 1], [], []>} : vector<8x128xbf16>, vector<128x128xbf16>, vector<8x128xf32> -> vector<8x128xf32>
    %c0_21 = arith.constant 0 : index
    %c0_22 = arith.constant 0 : index
    %28 = vector.load %arg9[%c0_21, %c0_22] : memref<1x128xf32, #tpu.memory_space<vmem>>, vector<1x128xf32>
    %29 = vector.broadcast %28 : vector<1x128xf32> to vector<8x128xf32>
    %30 = arith.addf %27, %29 : vector<8x128xf32>
    %c0_23 = arith.constant 0 : index
    %c0_24 = arith.constant 0 : index
    %31 = vector.load %arg10[%c0_23, %c0_24] : memref<8x128xf32, #tpu.memory_space<vmem>>, vector<8x128xf32>
    tpu.vector_store %arg10[%c0_23, %c0_24], %30 {strides = array<i32>} : memref<8x128xf32, #tpu.memory_space<vmem>>, vector<8x128xf32>,
    return
  }
  func.func @transform_0(%arg0: i32) -> (i32, i32) {
    %c0_i32 = arith.constant 0 : i32
    %c0_i32_0 = arith.constant 0 : i32
    return %arg0, %c0_i32 : i32, i32
  }
  func.func @transform_1(%arg0: i32) -> (i32, i32) {
    %c0_i32 = arith.constant 0 : i32
    %c0_i32_0 = arith.constant 0 : i32
    %c0_i32_1 = arith.constant 0 : i32
    return %c0_i32, %c0_i32_0 : i32, i32
  }
  func.func @transform_2(%arg0: i32) -> (i32, i32) {
    %c0_i32 = arith.constant 0 : i32
    %c0_i32_0 = arith.constant 0 : i32
    %c0_i32_1 = arith.constant 0 : i32
    return %c0_i32, %c0_i32_0 : i32, i32
  }
  func.func @transform_3(%arg0: i32) -> (i32, i32) {
    %c0_i32 = arith.constant 0 : i32
    %c0_i32_0 = arith.constant 0 : i32
    %c0_i32_1 = arith.constant 0 : i32
    return %c0_i32, %c0_i32_0 : i32, i32
  }
  func.func @transform_4(%arg0: i32) -> (i32, i32) {
    %c0_i32 = arith.constant 0 : i32
    %c0_i32_0 = arith.constant 0 : i32
    %c0_i32_1 = arith.constant 0 : i32
    return %c0_i32, %c0_i32_0 : i32, i32
  }
  func.func @transform_5(%arg0: i32) -> (i32, i32) {
    %c0_i32 = arith.constant 0 : i32
    %c0_i32_0 = arith.constant 0 : i32
    %c0_i32_1 = arith.constant 0 : i32
    return %c0_i32, %c0_i32_0 : i32, i32
  }
  func.func @transform_6(%arg0: i32) -> (i32, i32) {
    %c0_i32 = arith.constant 0 : i32
    %c0_i32_0 = arith.constant 0 : i32
    %c0_i32_1 = arith.constant 0 : i32
    return %c0_i32, %c0_i32_0 : i32, i32
  }
  func.func @transform_7(%arg0: i32) -> (i32, i32) {
    %c0_i32 = arith.constant 0 : i32
    %c0_i32_0 = arith.constant 0 : i32
    %c0_i32_1 = arith.constant 0 : i32
    return %c0_i32, %c0_i32_0 : i32, i32
  }
  func.func @transform_8(%arg0: i32) -> (i32, i32) {
    %c0_i32 = arith.constant 0 : i32
    %c0_i32_0 = arith.constant 0 : i32
    %c0_i32_1 = arith.constant 0 : i32
    return %c0_i32, %c0_i32_0 : i32, i32
  }
  func.func @transform_9(%arg0: i32) -> (i32, i32) {
    %c0_i32 = arith.constant 0 : i32
    %c0_i32_0 = arith.constant 0 : i32
    return %arg0, %c0_i32 : i32, i32
  }
}

</mosaic_0001>

<llo_original>
// kernel: mlp_forward.1
$region0: #{mlp_forward.1}
  #allocation0 [shape = 'u32[]', space=smem, size = 0x4, offset = 0x4, fixed_abs, tag = 'smem constant byte address 0x4 - core index']
  #allocation1 [shape = 'u32[72,128]{1,0:T(1,128)}', space=vmem, size = 0x9000, scoped, tag = 'internal scratch']
  %s0 = inlined_call_operand.hbm [shape: f32[8,64], index: 0, kind: input, shape index: {}]
  %s1 = inlined_call_operand.hbm [shape: bf16[64,512], index: 1, kind: input, shape index: {}]
  %s2 = inlined_call_operand.hbm [shape: f32[1,512], index: 2, kind: input, shape index: {}]
  %s3 = inlined_call_operand.hbm [shape: bf16[512,256], index: 3, kind: input, shape index: {}]
  %s4 = inlined_call_operand.vmem [shape: f32[1,256], index: 4, kind: input, shape index: {}]
  %s5 = inlined_call_operand.hbm [shape: bf16[256,128], index: 5, kind: input, shape index: {}]
  %s6 = inlined_call_operand.vmem [shape: f32[1,128], index: 6, kind: input, shape index: {}]
  %s7 = inlined_call_operand.hbm [shape: bf16[128,128], index: 7, kind: input, shape index: {}]
  %s8 = inlined_call_operand.vmem [shape: f32[1,128], index: 8, kind: input, shape index: {}]
  %s9 = inlined_call_operand.hbm [shape: f32[8,128], index: 9, kind: output, shape index: {}]
  %s10 = sld [smem:[#allocation0]]
  $region70: #{mlp_forward.1} parent=0
    _
  %s12 = ssub.s32 1, %s10
  %s13 = scalar_select 0, %s12, %s10
  $region1: #{mlp_forward.1} parent=0
    #allocation2 [shape = 'u8[4096]{0}', space=vmem, size = 0x1000, scoped, tag = 'input window, operand 0, single buffered']
    #allocation3 [shape = 's32[1]{0}', space=sflag, size = 0x4, scoped, tag = 'scoped memory for mlp_forward.1']
    #allocation4 [shape = 's32[1]{0}', space=sflag, size = 0x4, scoped, tag = 'scoped memory for mlp_forward.1']
    #allocation5 [shape = 'u8[65536]{0}', space=vmem, size = 0x10000, scoped, tag = 'input window, operand 1, single buffered']
    #allocation6 [shape = 's32[1]{0}', space=sflag, size = 0x4, scoped, tag = 'scoped memory for mlp_forward.1']
    #allocation7 [shape = 'u8[2048]{0}', space=vmem, size = 0x800, scoped, tag = 'input window, operand 2, single buffered']
    #allocation8 [shape = 'u8[262144]{0}', space=vmem, size = 0x40000, scoped, tag = 'input window, operand 3, single buffered']
    #allocation9 [shape = 's32[1]{0}', space=sflag, size = 0x4, scoped, tag = 'scoped memory for mlp_forward.1']
    #allocation10 [shape = 'u8[65536]{0}', space=vmem, size = 0x10000, scoped, tag = 'input window, operand 5, single buffered']
    #allocation11 [shape = 'u8[32768]{0}', space=vmem, size = 0x8000, scoped, tag = 'input window, operand 7, single buffered']
    #allocation12 [shape = 's32[1]{0}', space=sflag, size = 0x4, scoped, tag = 'scoped memory for mlp_forward.1']
    #allocation13 [shape = 'u8[4096]{0}', space=vmem, size = 0x1000, scoped, tag = 'output window, operand 0, single buffered']
    %14 = vsyncpa [#allocation3], 0
    %15 = vsyncpa [#allocation6], 0
    %16 = vsyncpa [#allocation9], 0
    %17 = vsyncpa [#allocation12], 0
    %18 = vsyncpa [#allocation4], 0
    // Predicated region
    $region2: #{mlp_forward.1} parent=1 // pred_check
      _
    $region3: #{mlp_forward.1} parent=1 // pred_check_branch
      %20 = sbr.rel (0) target = $region5
    $region4: #{mlp_forward.1} parent=1 // pred_region
      %22 = vsyncadd [#allocation3], 0
      %s24 = sshll.u32 %s0, 4
      %s25 = int_to_ptr.hbm [resolvable:$true] %s24
      %s26 = sshll.u32 [#allocation2], 4
      %s27 = int_to_ptr.vmem [resolvable:$true] %s26
      %29 = dma.hbm_to_vmem [thread:$0]  %s25, 128, %s27, [#allocation3]
    $region5: #{mlp_forward.1} parent=1 // pred_fallthru
      _
    // Predicated region
    $region6: #{mlp_forward.1} parent=1 // pred_check
      _
    $region7: #{mlp_forward.1} parent=1 // pred_check_branch
      %31 = sbr.rel (0) target = $region9
    $region8: #{mlp_forward.1} parent=1 // pred_region
      %33 = vsyncadd [#allocation6], 0
      %s34 = sshll.u32 %s1, 4
      %s35 = int_to_ptr.hbm [resolvable:$true] %s34
      %s36 = sshll.u32 [#allocation5], 4
      %s37 = int_to_ptr.vmem [resolvable:$true] %s36
      %42 = dma.hbm_to_vmem [thread:$0]  %s35, 2048, %s37, [#allocation6], 256, 256, 16
    $region9: #{mlp_forward.1} parent=1 // pred_fallthru
      _
    // Predicated region
    $region10: #{mlp_forward.1} parent=1 // pred_check
      _
    $region11: #{mlp_forward.1} parent=1 // pred_check_branch
      %44 = sbr.rel (0) target = $region13
    $region12: #{mlp_forward.1} parent=1 // pred_region
      %46 = vsyncadd [#allocation6], 0
      %s48 = sshll.u32 %s2, 4
      %s49 = int_to_ptr.hbm [resolvable:$true] %s48
      %s50 = sshll.u32 [#allocation7], 4
      %s51 = int_to_ptr.vmem [resolvable:$true] %s50
      %53 = dma.hbm_to_vmem [thread:$0]  %s49, 64, %s51, [#allocation6]
    $region13: #{mlp_forward.1} parent=1 // pred_fallthru
      _
    // Predicated region
    $region14: #{mlp_forward.1} parent=1 // pred_check
      _
    $region15: #{mlp_forward.1} parent=1 // pred_check_branch
      %55 = sbr.rel (0) target = $region17
    $region16: #{mlp_forward.1} parent=1 // pred_region
      %57 = vsyncadd [#allocation9], 0
      %s58 = sshll.u32 %s3, 4
      %s59 = int_to_ptr.hbm [resolvable:$true] %s58
      %s60 = sshll.u32 [#allocation8], 4
      %s61 = int_to_ptr.vmem [resolvable:$true] %s60
      %66 = dma.hbm_to_vmem [thread:$0]  %s59, 8192, %s61, [#allocation9], 128, 128, 8
    $region17: #{mlp_forward.1} parent=1 // pred_fallthru
      _
    // Predicated region
    $region18: #{mlp_forward.1} parent=1 // pred_check
      _
    $region19: #{mlp_forward.1} parent=1 // pred_check_branch
      %68 = sbr.rel (0) target = $region21
    $region20: #{mlp_forward.1} parent=1 // pred_region
      _
    $region21: #{mlp_forward.1} parent=1 // pred_fallthru
      _
    // Predicated region
    $region22: #{mlp_forward.1} parent=1 // pred_check
      _
    $region23: #{mlp_forward.1} parent=1 // pred_check_branch
      %70 = sbr.rel (0) target = $region25
    $region24: #{mlp_forward.1} parent=1 // pred_region
      %72 = vsyncadd [#allocation9], 0
      %s73 = sshll.u32 %s5, 4
      %s74 = int_to_ptr.hbm [resolvable:$true] %s73
      %s75 = sshll.u32 [#allocation10], 4
      %s76 = int_to_ptr.vmem [resolvable:$true] %s75
      %81 = dma.hbm_to_vmem [thread:$0]  %s74, 2048, %s76, [#allocation9], 64, 64, 4
    $region25: #{mlp_forward.1} parent=1 // pred_fallthru
      _
    // Predicated region
    $region26: #{mlp_forward.1} parent=1 // pred_check
      _
    $region27: #{mlp_forward.1} parent=1 // pred_check_branch
      %83 = sbr.rel (0) target = $region29
    $region28: #{mlp_forward.1} parent=1 // pred_region
      _
    $region29: #{mlp_forward.1} parent=1 // pred_fallthru
      _
    // Predicated region
    $region30: #{mlp_forward.1} parent=1 // pred_check
      _
    $region31: #{mlp_forward.1} parent=1 // pred_check_branch
      %85 = sbr.rel (0) target = $region33
    $region32: #{mlp_forward.1} parent=1 // pred_region
      %87 = vsyncadd [#allocation12], 0
      %s88 = sshll.u32 %s7, 4
      %s89 = int_to_ptr.hbm [resolvable:$true] %s88
      %s90 = sshll.u32 [#allocation11], 4
      %s91 = int_to_ptr.vmem [resolvable:$true] %s90
      %96 = dma.hbm_to_vmem [thread:$0]  %s89, 1024, %s91, [#allocation12], 64, 64, 4
    $region33: #{mlp_forward.1} parent=1 // pred_fallthru
      _
    // Predicated region
    $region34: #{mlp_forward.1} parent=1 // pred_check
      _
    $region35: #{mlp_forward.1} parent=1 // pred_check_branch
      %98 = sbr.rel (0) target = $region37
    $region36: #{mlp_forward.1} parent=1 // pred_region
      _
    $region37: #{mlp_forward.1} parent=1 // pred_fallthru
      _
    // Predicated region
    $region38: #{mlp_forward.1} parent=1 // pred_check
      _
    $region39: #{mlp_forward.1} parent=1 // pred_check_branch
      %100 = sbr.rel (0) target = $region41
    $region40: #{mlp_forward.1} parent=1 // pred_region
      %102 = dma.done [#allocation3], 128
    $region41: #{mlp_forward.1} parent=1 // pred_fallthru
      _
    // Predicated region
    $region42: #{mlp_forward.1} parent=1 // pred_check
      _
    $region43: #{mlp_forward.1} parent=1 // pred_check_branch
      %104 = sbr.rel (0) target = $region45
    $region44: #{mlp_forward.1} parent=1 // pred_region
      %106 = dma.done [#allocation6], 2048
    $region45: #{mlp_forward.1} parent=1 // pred_fallthru
      _
    // Predicated region
    $region46: #{mlp_forward.1} parent=1 // pred_check
      _
    $region47: #{mlp_forward.1} parent=1 // pred_check_branch
      %108 = sbr.rel (0) target = $region49
    $region48: #{mlp_forward.1} parent=1 // pred_region
      %110 = dma.done [#allocation6], 64
    $region49: #{mlp_forward.1} parent=1 // pred_fallthru
      _
    // Predicated region
    $region50: #{mlp_forward.1} parent=1 // pred_check
      _
    $region51: #{mlp_forward.1} parent=1 // pred_check_branch
      %112 = sbr.rel (0) target = $region53
    $region52: #{mlp_forward.1} parent=1 // pred_region
      %114 = dma.done [#allocation9], 8192
    $region53: #{mlp_forward.1} parent=1 // pred_fallthru
      _
    // Predicated region
    $region54: #{mlp_forward.1} parent=1 // pred_check
      _
    $region55: #{mlp_forward.1} parent=1 // pred_check_branch
      %116 = sbr.rel (0) target = $region57
    $region56: #{mlp_forward.1} parent=1 // pred_region
      %118 = dma.done [#allocation9], 2048
    $region57: #{mlp_forward.1} parent=1 // pred_fallthru
      _
    // Predicated region
    $region58: #{mlp_forward.1} parent=1 // pred_check
      _
    $region59: #{mlp_forward.1} parent=1 // pred_check_branch
      %120 = sbr.rel (0) target = $region61
    $region60: #{mlp_forward.1} parent=1 // pred_region
      %122 = dma.done [#allocation12], 1024
    $region61: #{mlp_forward.1} parent=1 // pred_fallthru
      _
    %v124 = vld [vmem:[#allocation2] sm:$0xff]
    %v125 = vpack.c.bf16 %v124, %v124
    %v126 = vld [vmem:[#allocation5] sm:$0xff]
    %v127 = vld [vmem:[#allocation5 + $0x8] sm:$0xff]
    %v128 = vld [vmem:[#allocation5 + $0x10] sm:$0xff]
    %v129 = vld [vmem:[#allocation5 + $0x18] sm:$0xff]
    %v130 = vld [vmem:[#allocation5 + $0x20] sm:$0xff]
    %v131 = vld [vmem:[#allocation5 + $0x28] sm:$0xff]
    %v132 = vld [vmem:[#allocation5 + $0x30] sm:$0xff]
    %v133 = vld [vmem:[#allocation5 + $0x38] sm:$0xff]
    %v134 = vld [vmem:[#allocation5 + $0x40] sm:$0xff]
    %v135 = vld [vmem:[#allocation5 + $0x48] sm:$0xff]
    %v136 = vld [vmem:[#allocation5 + $0x50] sm:$0xff]
    %v137 = vld [vmem:[#allocation5 + $0x58] sm:$0xff]
    %v138 = vld [vmem:[#allocation5 + $0x60] sm:$0xff]
    %v139 = vld [vmem:[#allocation5 + $0x68] sm:$0xff]
    %v140 = vld [vmem:[#allocation5 + $0x70] sm:$0xff]
    %v141 = vld [vmem:[#allocation5 + $0x78] sm:$0xff]
    %v142 = vld [vmem:[#allocation7] sm:$0xf]
    %v144 = vperm.slane %v142, 0
    %v145 = vperm.slane %v142, 1
    %v146 = vperm.slane %v142, 2
    %v147 = vperm.slane %v142, 3
    %v168 = vunpack.c.l.b16 %v126
    %v169 = vunpack.c.h.b16 %v126
    %v170 = vunpack.c.l.b16 %v127
    %v171 = vunpack.c.h.b16 %v127
    %v172 = vunpack.c.l.b16 %v128
    %v173 = vunpack.c.h.b16 %v128
    %v174 = vunpack.c.l.b16 %v129
    %v175 = vunpack.c.h.b16 %v129
    %v176 = vunpack.c.l.b16 %v130
    %v177 = vunpack.c.h.b16 %v130
    %v178 = vunpack.c.l.b16 %v131
    %v179 = vunpack.c.h.b16 %v131
    %v180 = vunpack.c.l.b16 %v132
    %v181 = vunpack.c.h.b16 %v132
    %v182 = vunpack.c.l.b16 %v133
    %v183 = vunpack.c.h.b16 %v133
    %v184 = vunpack.c.l.b16 %v134
    %v185 = vunpack.c.h.b16 %v134
    %v186 = vunpack.c.l.b16 %v135
    %v187 = vunpack.c.h.b16 %v135
    %v188 = vunpack.c.l.b16 %v136
    %v189 = vunpack.c.h.b16 %v136
    %v190 = vunpack.c.l.b16 %v137
    %v191 = vunpack.c.h.b16 %v137
    %v192 = vunpack.c.l.b16 %v138
    %v193 = vunpack.c.h.b16 %v138
    %v194 = vunpack.c.l.b16 %v139
    %v195 = vunpack.c.h.b16 %v139
    %v196 = vunpack.c.l.b16 %v140
    %v197 = vunpack.c.h.b16 %v140
    %v198 = vunpack.c.l.b16 %v141
    %v199 = vunpack.c.h.b16 %v141
    %v200 = vpack.c.b16 %v172, %v168
    %v201 = vpack.c.b16 %v173, %v169
    %v202 = vpack.c.b16 %v174, %v170
    %v203 = vpack.c.b16 %v175, %v171
    %v204 = vpack.c.b16 %v180, %v176
    %v205 = vpack.c.b16 %v181, %v177
    %v206 = vpack.c.b16 %v182, %v178
    %v207 = vpack.c.b16 %v183, %v179
    %v208 = vpack.c.b16 %v188, %v184
    %v209 = vpack.c.b16 %v189, %v185
    %v210 = vpack.c.b16 %v190, %v186
    %v211 = vpack.c.b16 %v191, %v187
    %v212 = vpack.c.b16 %v196, %v192
    %v213 = vpack.c.b16 %v197, %v193
    %v214 = vpack.c.b16 %v198, %v194
    %v215 = vpack.c.b16 %v199, %v195
    %vm232 = vcmask 523264
    %v234 = vsel %vm232, %v125, 0
    %236 = vmatpush.bf16.msra.mxu0 0
    %237 = vmatpush.bf16.msra.mxu0 0
    %238 = vmatpush.bf16.msra.mxu0 0
    %239 = vmatpush.bf16.msra.mxu0 0
    %240 = vmatpush.bf16.msra.mxu0 %v212
    %241 = vmatpush.bf16.msra.mxu0 %v208
    %242 = vmatpush.bf16.msra.mxu0 %v204
    %243 = vmatpush.bf16.msra.mxu0 %v200
    %244 = vmatmul.bf16.gmra.mxu0 %v234
    %v245 = vpop.f32.mrf.mxu0
    %v246 = vadd.f32 %v144, %v245
    %v247 = vpop.f32.mrf.mxu0
    %248 = vdwg.mxu0
    %249 = vmatpush.bf16.msra.mxu0 0
    %250 = vmatpush.bf16.msra.mxu0 0
    %251 = vmatpush.bf16.msra.mxu0 0
    %252 = vmatpush.bf16.msra.mxu0 0
    %253 = vmatpush.bf16.msra.mxu0 %v213
    %254 = vmatpush.bf16.msra.mxu0 %v209
    %255 = vmatpush.bf16.msra.mxu0 %v205
    %256 = vmatpush.bf16.msra.mxu0 %v201
    %257 = vmatmul.bf16.gmra.mxu0 %v234
    %v258 = vpop.f32.mrf.mxu0
    %v259 = vadd.f32 %v145, %v258
    %v260 = vpop.f32.mrf.mxu0
    %261 = vdwg.mxu0
    %262 = vmatpush.bf16.msra.mxu0 0
    %263 = vmatpush.bf16.msra.mxu0 0
    %264 = vmatpush.bf16.msra.mxu0 0
    %265 = vmatpush.bf16.msra.mxu0 0
    %266 = vmatpush.bf16.msra.mxu0 %v214
    %267 = vmatpush.bf16.msra.mxu0 %v210
    %268 = vmatpush.bf16.msra.mxu0 %v206
    %269 = vmatpush.bf16.msra.mxu0 %v202
    %270 = vmatmul.bf16.gmra.mxu0 %v234
    %v271 = vpop.f32.mrf.mxu0
    %v272 = vadd.f32 %v146, %v271
    %v273 = vpop.f32.mrf.mxu0
    %274 = vdwg.mxu0
    %275 = vmatpush.bf16.msra.mxu0 0
    %276 = vmatpush.bf16.msra.mxu0 0
    %277 = vmatpush.bf16.msra.mxu0 0
    %278 = vmatpush.bf16.msra.mxu0 0
    %279 = vmatpush.bf16.msra.mxu0 %v215
    %280 = vmatpush.bf16.msra.mxu0 %v211
    %281 = vmatpush.bf16.msra.mxu0 %v207
    %282 = vmatpush.bf16.msra.mxu0 %v203
    %283 = vmatmul.bf16.gmra.mxu0 %v234
    %v284 = vpop.f32.mrf.mxu0
    %v285 = vadd.f32 %v147, %v284
    %v286 = vpop.f32.mrf.mxu0
    %287 = vdwg.mxu0
    %v288 = vmax.f32 %v246, 0.0
    %v289 = vmax.f32 %v259, 0.0
    %v290 = vmax.f32 %v272, 0.0
    %v291 = vmax.f32 %v285, 0.0
    %v292 = vpack.c.bf16 %v288, %v288
    %v293 = vpack.c.bf16 %v289, %v289
    %v294 = vpack.c.bf16 %v290, %v290
    %v295 = vpack.c.bf16 %v291, %v291
    %v296 = vld [vmem:[#allocation8] sm:$0xff]
    %v297 = vld [vmem:[#allocation8 + $0x8] sm:$0xff]
    %v298 = vld [vmem:[#allocation8 + $0x10] sm:$0xff]
    %v299 = vld [vmem:[#allocation8 + $0x18] sm:$0xff]
    %v300 = vld [vmem:[#allocation8 + $0x20] sm:$0xff]
    %v301 = vld [vmem:[#allocation8 + $0x28] sm:$0xff]
    %v302 = vld [vmem:[#allocation8 + $0x30] sm:$0xff]
    %v303 = vld [vmem:[#allocation8 + $0x38] sm:$0xff]
    %v304 = vld [vmem:[#allocation8 + $0x40] sm:$0xff]
    %v305 = vld [vmem:[#allocation8 + $0x48] sm:$0xff]
    %v306 = vld [vmem:[#allocation8 + $0x50] sm:$0xff]
    %v307 = vld [vmem:[#allocation8 + $0x58] sm:$0xff]
    %v308 = vld [vmem:[#allocation8 + $0x60] sm:$0xff]
    %v309 = vld [vmem:[#allocation8 + $0x68] sm:$0xff]
    %v310 = vld [vmem:[#allocation8 + $0x70] sm:$0xff]
    %v311 = vld [vmem:[#allocation8 + $0x78] sm:$0xff]
    %v312 = vld [vmem:[#allocation8 + $0x80] sm:$0xff]
    %v313 = vld [vmem:[#allocation8 + $0x88] sm:$0xff]
    %v314 = vld [vmem:[#allocation8 + $0x90] sm:$0xff]
    %v315 = vld [vmem:[#allocation8 + $0x98] sm:$0xff]
    %v316 = vld [vmem:[#allocation8 + $0xa0] sm:$0xff]
    %v317 = vld [vmem:[#allocation8 + $0xa8] sm:$0xff]
    %v318 = vld [vmem:[#allocation8 + $0xb0] sm:$0xff]
    %v319 = vld [vmem:[#allocation8 + $0xb8] sm:$0xff]
    %v320 = vld [vmem:[#allocation8 + $0xc0] sm:$0xff]
    %v321 = vld [vmem:[#allocation8 + $0xc8] sm:$0xff]
    %v322 = vld [vmem:[#allocation8 + $0xd0] sm:$0xff]
    %v323 = vld [vmem:[#allocation8 + $0xd8] sm:$0xff]
    %v324 = vld [vmem:[#allocation8 + $0xe0] sm:$0xff]
    %v325 = vld [vmem:[#allocation8 + $0xe8] sm:$0xff]
    %v326 = vld [vmem:[#allocation8 + $0xf0] sm:$0xff]
    %v327 = vld [vmem:[#allocation8 + $0xf8] sm:$0xff]
    %v328 = vld [vmem:[#allocation8 + $0x100] sm:$0xff]
    %v329 = vld [vmem:[#allocation8 + $0x108] sm:$0xff]
    %v330 = vld [vmem:[#allocation8 + $0x110] sm:$0xff]
    %v331 = vld [vmem:[#allocation8 + $0x118] sm:$0xff]
    %v332 = vld [vmem:[#allocation8 + $0x120] sm:$0xff]
    %v333 = vld [vmem:[#allocation8 + $0x128] sm:$0xff]
    %v334 = vld [vmem:[#allocation8 + $0x130] sm:$0xff]
    %v335 = vld [vmem:[#allocation8 + $0x138] sm:$0xff]
    %v336 = vld [vmem:[#allocation8 + $0x140] sm:$0xff]
    %v337 = vld [vmem:[#allocation8 + $0x148] sm:$0xff]
    %v338 = vld [vmem:[#allocation8 + $0x150] sm:$0xff]
    %v339 = vld [vmem:[#allocation8 + $0x158] sm:$0xff]
    %v340 = vld [vmem:[#allocation8 + $0x160] sm:$0xff]
    %v341 = vld [vmem:[#allocation8 + $0x168] sm:$0xff]
    %v342 = vld [vmem:[#allocation8 + $0x170] sm:$0xff]
    %v343 = vld [vmem:[#allocation8 + $0x178] sm:$0xff]
    %v344 = vld [vmem:[#allocation8 + $0x180] sm:$0xff]
    %v345 = vld [vmem:[#allocation8 + $0x188] sm:$0xff]
    %v346 = vld [vmem:[#allocation8 + $0x190] sm:$0xff]
    %v347 = vld [vmem:[#allocation8 + $0x198] sm:$0xff]
    %v348 = vld [vmem:[#allocation8 + $0x1a0] sm:$0xff]
    %v349 = vld [vmem:[#allocation8 + $0x1a8] sm:$0xff]
    %v350 = vld [vmem:[#allocation8 + $0x1b0] sm:$0xff]
    %v351 = vld [vmem:[#allocation8 + $0x1b8] sm:$0xff]
    %v352 = vld [vmem:[#allocation8 + $0x1c0] sm:$0xff]
    %v353 = vld [vmem:[#allocation8 + $0x1c8] sm:$0xff]
    %v354 = vld [vmem:[#allocation8 + $0x1d0] sm:$0xff]
    %v355 = vld [vmem:[#allocation8 + $0x1d8] sm:$0xff]
    %v356 = vld [vmem:[#allocation8 + $0x1e0] sm:$0xff]
    %v357 = vld [vmem:[#allocation8 + $0x1e8] sm:$0xff]
    %v358 = vld [vmem:[#allocation8 + $0x1f0] sm:$0xff]
    %v359 = vld [vmem:[#allocation8 + $0x1f8] sm:$0xff]
    %v360 = vld [vmem:[%s4] sm:$0x3]
    %v362 = vperm.slane %v360, 0
    %v363 = vperm.slane %v360, 1
    %v430 = vunpack.c.l.b16 %v296
    %v431 = vunpack.c.h.b16 %v296
    %v432 = vunpack.c.l.b16 %v297
    %v433 = vunpack.c.h.b16 %v297
    %v434 = vunpack.c.l.b16 %v298
    %v435 = vunpack.c.h.b16 %v298
    %v436 = vunpack.c.l.b16 %v299
    %v437 = vunpack.c.h.b16 %v299
    %v438 = vunpack.c.l.b16 %v300
    %v439 = vunpack.c.h.b16 %v300
    %v440 = vunpack.c.l.b16 %v301
    %v441 = vunpack.c.h.b16 %v301
    %v442 = vunpack.c.l.b16 %v302
    %v443 = vunpack.c.h.b16 %v302
    %v444 = vunpack.c.l.b16 %v303
    %v445 = vunpack.c.h.b16 %v303
    %v446 = vunpack.c.l.b16 %v304
    %v447 = vunpack.c.h.b16 %v304
    %v448 = vunpack.c.l.b16 %v305
    %v449 = vunpack.c.h.b16 %v305
    %v450 = vunpack.c.l.b16 %v306
    %v451 = vunpack.c.h.b16 %v306
    %v452 = vunpack.c.l.b16 %v307
    %v453 = vunpack.c.h.b16 %v307
    %v454 = vunpack.c.l.b16 %v308
    %v455 = vunpack.c.h.b16 %v308
    %v456 = vunpack.c.l.b16 %v309
    %v457 = vunpack.c.h.b16 %v309
    %v458 = vunpack.c.l.b16 %v310
    %v459 = vunpack.c.h.b16 %v310
    %v460 = vunpack.c.l.b16 %v311
    %v461 = vunpack.c.h.b16 %v311
    %v462 = vunpack.c.l.b16 %v312
    %v463 = vunpack.c.h.b16 %v312
    %v464 = vunpack.c.l.b16 %v313
    %v465 = vunpack.c.h.b16 %v313
    %v466 = vunpack.c.l.b16 %v314
    %v467 = vunpack.c.h.b16 %v314
    %v468 = vunpack.c.l.b16 %v315
    %v469 = vunpack.c.h.b16 %v315
    %v470 = vunpack.c.l.b16 %v316
    %v471 = vunpack.c.h.b16 %v316
    %v472 = vunpack.c.l.b16 %v317
    %v473 = vunpack.c.h.b16 %v317
    %v474 = vunpack.c.l.b16 %v318
    %v475 = vunpack.c.h.b16 %v318
    %v476 = vunpack.c.l.b16 %v319
    %v477 = vunpack.c.h.b16 %v319
    %v478 = vunpack.c.l.b16 %v320
    %v479 = vunpack.c.h.b16 %v320
    %v480 = vunpack.c.l.b16 %v321
    %v481 = vunpack.c.h.b16 %v321
    %v482 = vunpack.c.l.b16 %v322
    %v483 = vunpack.c.h.b16 %v322
    %v484 = vunpack.c.l.b16 %v323
    %v485 = vunpack.c.h.b16 %v323
    %v486 = vunpack.c.l.b16 %v324
    %v487 = vunpack.c.h.b16 %v324
    %v488 = vunpack.c.l.b16 %v325
    %v489 = vunpack.c.h.b16 %v325
    %v490 = vunpack.c.l.b16 %v326
    %v491 = vunpack.c.h.b16 %v326
    %v492 = vunpack.c.l.b16 %v327
    %v493 = vunpack.c.h.b16 %v327
    %v494 = vunpack.c.l.b16 %v328
    %v495 = vunpack.c.h.b16 %v328
    %v496 = vunpack.c.l.b16 %v329
    %v497 = vunpack.c.h.b16 %v329
    %v498 = vunpack.c.l.b16 %v330
    %v499 = vunpack.c.h.b16 %v330
    %v500 = vunpack.c.l.b16 %v331
    %v501 = vunpack.c.h.b16 %v331
    %v502 = vunpack.c.l.b16 %v332
    %v503 = vunpack.c.h.b16 %v332
    %v504 = vunpack.c.l.b16 %v333
    %v505 = vunpack.c.h.b16 %v333
    %v506 = vunpack.c.l.b16 %v334
    %v507 = vunpack.c.h.b16 %v334
    %v508 = vunpack.c.l.b16 %v335
    %v509 = vunpack.c.h.b16 %v335
    %v510 = vunpack.c.l.b16 %v336
    %v511 = vunpack.c.h.b16 %v336
    %v512 = vunpack.c.l.b16 %v337
    %v513 = vunpack.c.h.b16 %v337
    %v514 = vunpack.c.l.b16 %v338
    %v515 = vunpack.c.h.b16 %v338
    %v516 = vunpack.c.l.b16 %v339
    %v517 = vunpack.c.h.b16 %v339
    %v518 = vunpack.c.l.b16 %v340
    %v519 = vunpack.c.h.b16 %v340
    %v520 = vunpack.c.l.b16 %v341
    %v521 = vunpack.c.h.b16 %v341
    %v522 = vunpack.c.l.b16 %v342
    %v523 = vunpack.c.h.b16 %v342
    %v524 = vunpack.c.l.b16 %v343
    %v525 = vunpack.c.h.b16 %v343
    %v526 = vunpack.c.l.b16 %v344
    %v527 = vunpack.c.h.b16 %v344
    %v528 = vunpack.c.l.b16 %v345
    %v529 = vunpack.c.h.b16 %v345
    %v530 = vunpack.c.l.b16 %v346
    %v531 = vunpack.c.h.b16 %v346
    %v532 = vunpack.c.l.b16 %v347
    %v533 = vunpack.c.h.b16 %v347
    %v534 = vunpack.c.l.b16 %v348
    %v535 = vunpack.c.h.b16 %v348
    %v536 = vunpack.c.l.b16 %v349
    %v537 = vunpack.c.h.b16 %v349
    %v538 = vunpack.c.l.b16 %v350
    %v539 = vunpack.c.h.b16 %v350
    %v540 = vunpack.c.l.b16 %v351
    %v541 = vunpack.c.h.b16 %v351
    %v542 = vunpack.c.l.b16 %v352
    %v543 = vunpack.c.h.b16 %v352
    %v544 = vunpack.c.l.b16 %v353
    %v545 = vunpack.c.h.b16 %v353
    %v546 = vunpack.c.l.b16 %v354
    %v547 = vunpack.c.h.b16 %v354
    %v548 = vunpack.c.l.b16 %v355
    %v549 = vunpack.c.h.b16 %v355
    %v550 = vunpack.c.l.b16 %v356
    %v551 = vunpack.c.h.b16 %v356
    %v552 = vunpack.c.l.b16 %v357
    %v553 = vunpack.c.h.b16 %v357
    %v554 = vunpack.c.l.b16 %v358
    %v555 = vunpack.c.h.b16 %v358
    %v556 = vunpack.c.l.b16 %v359
    %v557 = vunpack.c.h.b16 %v359
    %v558 = vpack.c.b16 %v432, %v430
    %v559 = vpack.c.b16 %v433, %v431
    %v560 = vpack.c.b16 %v436, %v434
    %v561 = vpack.c.b16 %v437, %v435
    %v562 = vpack.c.b16 %v440, %v438
    %v563 = vpack.c.b16 %v441, %v439
    %v564 = vpack.c.b16 %v444, %v442
    %v565 = vpack.c.b16 %v445, %v443
    %v566 = vpack.c.b16 %v448, %v446
    %v567 = vpack.c.b16 %v449, %v447
    %v568 = vpack.c.b16 %v452, %v450
    %v569 = vpack.c.b16 %v453, %v451
    %v570 = vpack.c.b16 %v456, %v454
    %v571 = vpack.c.b16 %v457, %v455
    %v572 = vpack.c.b16 %v460, %v458
    %v573 = vpack.c.b16 %v461, %v459
    %v574 = vpack.c.b16 %v464, %v462
    %v575 = vpack.c.b16 %v465, %v463
    %v576 = vpack.c.b16 %v468, %v466
    %v577 = vpack.c.b16 %v469, %v467
    %v578 = vpack.c.b16 %v472, %v470
    %v579 = vpack.c.b16 %v473, %v471
    %v580 = vpack.c.b16 %v476, %v474
    %v581 = vpack.c.b16 %v477, %v475
    %v582 = vpack.c.b16 %v480, %v478
    %v583 = vpack.c.b16 %v481, %v479
    %v584 = vpack.c.b16 %v484, %v482
    %v585 = vpack.c.b16 %v485, %v483
    %v586 = vpack.c.b16 %v488, %v486
    %v587 = vpack.c.b16 %v489, %v487
    %v588 = vpack.c.b16 %v492, %v490
    %v589 = vpack.c.b16 %v493, %v491
    %v590 = vpack.c.b16 %v496, %v494
    %v591 = vpack.c.b16 %v497, %v495
    %v592 = vpack.c.b16 %v500, %v498
    %v593 = vpack.c.b16 %v501, %v499
    %v594 = vpack.c.b16 %v504, %v502
    %v595 = vpack.c.b16 %v505, %v503
    %v596 = vpack.c.b16 %v508, %v506
    %v597 = vpack.c.b16 %v509, %v507
    %v598 = vpack.c.b16 %v512, %v510
    %v599 = vpack.c.b16 %v513, %v511
    %v600 = vpack.c.b16 %v516, %v514
    %v601 = vpack.c.b16 %v517, %v515
    %v602 = vpack.c.b16 %v520, %v518
    %v603 = vpack.c.b16 %v521, %v519
    %v604 = vpack.c.b16 %v524, %v522
    %v605 = vpack.c.b16 %v525, %v523
    %v606 = vpack.c.b16 %v528, %v526
    %v607 = vpack.c.b16 %v529, %v527
    %v608 = vpack.c.b16 %v532, %v530
    %v609 = vpack.c.b16 %v533, %v531
    %v610 = vpack.c.b16 %v536, %v534
    %v611 = vpack.c.b16 %v537, %v535
    %v612 = vpack.c.b16 %v540, %v538
    %v613 = vpack.c.b16 %v541, %v539
    %v614 = vpack.c.b16 %v544, %v542
    %v615 = vpack.c.b16 %v545, %v543
    %v616 = vpack.c.b16 %v548, %v546
    %v617 = vpack.c.b16 %v549, %v547
    %v618 = vpack.c.b16 %v552, %v550
    %v619 = vpack.c.b16 %v553, %v551
    %v620 = vpack.c.b16 %v556, %v554
    %v621 = vpack.c.b16 %v557, %v555
    %686 = vmatpush.bf16.msra.mxu0 %v572
    %687 = vmatpush.bf16.msra.mxu0 %v570
    %688 = vmatpush.bf16.msra.mxu0 %v568
    %689 = vmatpush.bf16.msra.mxu0 %v566
    %690 = vmatpush.bf16.msra.mxu0 %v564
    %691 = vmatpush.bf16.msra.mxu0 %v562
    %692 = vmatpush.bf16.msra.mxu0 %v560
    %693 = vmatpush.bf16.msra.mxu0 %v558
    %694 = vmatmul.bf16.gmra.mxu0 %v292
    %v695 = vpop.f32.mrf.mxu0
    %v696 = vadd.f32 %v362, %v695
    %v697 = vpop.f32.mrf.mxu0
    %698 = vdwg.mxu0
    %699 = vmatpush.bf16.msra.mxu0 %v588
    %700 = vmatpush.bf16.msra.mxu0 %v586
    %701 = vmatpush.bf16.msra.mxu0 %v584
    %702 = vmatpush.bf16.msra.mxu0 %v582
    %703 = vmatpush.bf16.msra.mxu0 %v580
    %704 = vmatpush.bf16.msra.mxu0 %v578
    %705 = vmatpush.bf16.msra.mxu0 %v576
    %706 = vmatpush.bf16.msra.mxu0 %v574
    %707 = vmatmul.bf16.gmra.mxu0 %v293
    %v708 = vpop.f32.mrf.mxu0
    %v709 = vadd.f32 %v696, %v708
    %v710 = vpop.f32.mrf.mxu0
    %711 = vdwg.mxu0
    %712 = vmatpush.bf16.msra.mxu0 %v604
    %713 = vmatpush.bf16.msra.mxu0 %v602
    %714 = vmatpush.bf16.msra.mxu0 %v600
    %715 = vmatpush.bf16.msra.mxu0 %v598
    %716 = vmatpush.bf16.msra.mxu0 %v596
    %717 = vmatpush.bf16.msra.mxu0 %v594
    %718 = vmatpush.bf16.msra.mxu0 %v592
    %719 = vmatpush.bf16.msra.mxu0 %v590
    %720 = vmatmul.bf16.gmra.mxu0 %v294
    %v721 = vpop.f32.mrf.mxu0
    %v722 = vadd.f32 %v709, %v721
    %v723 = vpop.f32.mrf.mxu0
    %724 = vdwg.mxu0
    %725 = vmatpush.bf16.msra.mxu0 %v620
    %726 = vmatpush.bf16.msra.mxu0 %v618
    %727 = vmatpush.bf16.msra.mxu0 %v616
    %728 = vmatpush.bf16.msra.mxu0 %v614
    %729 = vmatpush.bf16.msra.mxu0 %v612
    %730 = vmatpush.bf16.msra.mxu0 %v610
    %731 = vmatpush.bf16.msra.mxu0 %v608
    %732 = vmatpush.bf16.msra.mxu0 %v606
    %733 = vmatmul.bf16.gmra.mxu0 %v295
    %v734 = vpop.f32.mrf.mxu0
    %v735 = vadd.f32 %v722, %v734
    %v736 = vpop.f32.mrf.mxu0
    %737 = vdwg.mxu0
    %738 = vmatpush.bf16.msra.mxu0 %v573
    %739 = vmatpush.bf16.msra.mxu0 %v571
    %740 = vmatpush.bf16.msra.mxu0 %v569
    %741 = vmatpush.bf16.msra.mxu0 %v567
    %742 = vmatpush.bf16.msra.mxu0 %v565
    %743 = vmatpush.bf16.msra.mxu0 %v563
    %744 = vmatpush.bf16.msra.mxu0 %v561
    %745 = vmatpush.bf16.msra.mxu0 %v559
    %746 = vmatmul.bf16.gmra.mxu0 %v292
    %v747 = vpop.f32.mrf.mxu0
    %v748 = vadd.f32 %v363, %v747
    %v749 = vpop.f32.mrf.mxu0
    %750 = vdwg.mxu0
    %751 = vmatpush.bf16.msra.mxu0 %v589
    %752 = vmatpush.bf16.msra.mxu0 %v587
    %753 = vmatpush.bf16.msra.mxu0 %v585
    %754 = vmatpush.bf16.msra.mxu0 %v583
    %755 = vmatpush.bf16.msra.mxu0 %v581
    %756 = vmatpush.bf16.msra.mxu0 %v579
    %757 = vmatpush.bf16.msra.mxu0 %v577
    %758 = vmatpush.bf16.msra.mxu0 %v575
    %759 = vmatmul.bf16.gmra.mxu0 %v293
    %v760 = vpop.f32.mrf.mxu0
    %v761 = vadd.f32 %v748, %v760
    %v762 = vpop.f32.mrf.mxu0
    %763 = vdwg.mxu0
    %764 = vmatpush.bf16.msra.mxu0 %v605
    %765 = vmatpush.bf16.msra.mxu0 %v603
    %766 = vmatpush.bf16.msra.mxu0 %v601
    %767 = vmatpush.bf16.msra.mxu0 %v599
    %768 = vmatpush.bf16.msra.mxu0 %v597
    %769 = vmatpush.bf16.msra.mxu0 %v595
    %770 = vmatpush.bf16.msra.mxu0 %v593
    %771 = vmatpush.bf16.msra.mxu0 %v591
    %772 = vmatmul.bf16.gmra.mxu0 %v294
    %v773 = vpop.f32.mrf.mxu0
    %v774 = vadd.f32 %v761, %v773
    %v775 = vpop.f32.mrf.mxu0
    %776 = vdwg.mxu0
    %777 = vmatpush.bf16.msra.mxu0 %v621
    %778 = vmatpush.bf16.msra.mxu0 %v619
    %779 = vmatpush.bf16.msra.mxu0 %v617
    %780 = vmatpush.bf16.msra.mxu0 %v615
    %781 = vmatpush.bf16.msra.mxu0 %v613
    %782 = vmatpush.bf16.msra.mxu0 %v611
    %783 = vmatpush.bf16.msra.mxu0 %v609
    %784 = vmatpush.bf16.msra.mxu0 %v607
    %785 = vmatmul.bf16.gmra.mxu0 %v295
    %v786 = vpop.f32.mrf.mxu0
    %v787 = vadd.f32 %v774, %v786
    %v788 = vpop.f32.mrf.mxu0
    %789 = vdwg.mxu0
    %v790 = vmax.f32 %v735, 0.0
    %v791 = vmax.f32 %v787, 0.0
    %v792 = vpack.c.bf16 %v790, %v790
    %v793 = vpack.c.bf16 %v791, %v791
    %v794 = vld [vmem:[#allocation10] sm:$0xf]
    %v795 = vld [vmem:[#allocation10 + $0x4] sm:$0xf]
    %v796 = vld [vmem:[#allocation10 + $0x8] sm:$0xf]
    %v797 = vld [vmem:[#allocation10 + $0xc] sm:$0xf]
    %v798 = vld [vmem:[#allocation10 + $0x10] sm:$0xf]
    %v799 = vld [vmem:[#allocation10 + $0x14] sm:$0xf]
    %v800 = vld [vmem:[#allocation10 + $0x18] sm:$0xf]
    %v801 = vld [vmem:[#allocation10 + $0x1c] sm:$0xf]
    %v802 = vld [vmem:[#allocation10 + $0x20] sm:$0xf]
    %v803 = vld [vmem:[#allocation10 + $0x24] sm:$0xf]
    %v804 = vld [vmem:[#allocation10 + $0x28] sm:$0xf]
    %v805 = vld [vmem:[#allocation10 + $0x2c] sm:$0xf]
    %v806 = vld [vmem:[#allocation10 + $0x30] sm:$0xf]
    %v807 = vld [vmem:[#allocation10 + $0x34] sm:$0xf]
    %v808 = vld [vmem:[#allocation10 + $0x38] sm:$0xf]
    %v809 = vld [vmem:[#allocation10 + $0x3c] sm:$0xf]
    %v810 = vld [vmem:[#allocation10 + $0x40] sm:$0xf]
    %v811 = vld [vmem:[#allocation10 + $0x44] sm:$0xf]
    %v812 = vld [vmem:[#allocation10 + $0x48] sm:$0xf]
    %v813 = vld [vmem:[#allocation10 + $0x4c] sm:$0xf]
    %v814 = vld [vmem:[#allocation10 + $0x50] sm:$0xf]
    %v815 = vld [vmem:[#allocation10 + $0x54] sm:$0xf]
    %v816 = vld [vmem:[#allocation10 + $0x58] sm:$0xf]
    %v817 = vld [vmem:[#allocation10 + $0x5c] sm:$0xf]
    %v818 = vld [vmem:[#allocation10 + $0x60] sm:$0xf]
    %v819 = vld [vmem:[#allocation10 + $0x64] sm:$0xf]
    %v820 = vld [vmem:[#allocation10 + $0x68] sm:$0xf]
    %v821 = vld [vmem:[#allocation10 + $0x6c] sm:$0xf]
    %v822 = vld [vmem:[#allocation10 + $0x70] sm:$0xf]
    %v823 = vld [vmem:[#allocation10 + $0x74] sm:$0xf]
    %v824 = vld [vmem:[#allocation10 + $0x78] sm:$0xf]
    %v825 = vld [vmem:[#allocation10 + $0x7c] sm:$0xf]
    %v826 = vld [vmem:[%s6] sm:$0x1]
    %v828 = vperm.slane %v826, 0
    %v862 = vunpack.c.l.b16 %v794
    %v863 = vunpack.c.l.b16 %v795
    %v864 = vunpack.c.l.b16 %v796
    %v865 = vunpack.c.l.b16 %v797
    %v866 = vunpack.c.l.b16 %v798
    %v867 = vunpack.c.l.b16 %v799
    %v868 = vunpack.c.l.b16 %v800
    %v869 = vunpack.c.l.b16 %v801
    %v870 = vunpack.c.l.b16 %v802
    %v871 = vunpack.c.l.b16 %v803
    %v872 = vunpack.c.l.b16 %v804
    %v873 = vunpack.c.l.b16 %v805
    %v874 = vunpack.c.l.b16 %v806
    %v875 = vunpack.c.l.b16 %v807
    %v876 = vunpack.c.l.b16 %v808
    %v877 = vunpack.c.l.b16 %v809
    %v878 = vunpack.c.l.b16 %v810
    %v879 = vunpack.c.l.b16 %v811
    %v880 = vunpack.c.l.b16 %v812
    %v881 = vunpack.c.l.b16 %v813
    %v882 = vunpack.c.l.b16 %v814
    %v883 = vunpack.c.l.b16 %v815
    %v884 = vunpack.c.l.b16 %v816
    %v885 = vunpack.c.l.b16 %v817
    %v886 = vunpack.c.l.b16 %v818
    %v887 = vunpack.c.l.b16 %v819
    %v888 = vunpack.c.l.b16 %v820
    %v889 = vunpack.c.l.b16 %v821
    %v890 = vunpack.c.l.b16 %v822
    %v891 = vunpack.c.l.b16 %v823
    %v892 = vunpack.c.l.b16 %v824
    %v893 = vunpack.c.l.b16 %v825
    %v894 = vpack.c.b16 %v863, %v862
    %v895 = vpack.c.b16 %v865, %v864
    %v896 = vpack.c.b16 %v867, %v866
    %v897 = vpack.c.b16 %v869, %v868
    %v898 = vpack.c.b16 %v871, %v870
    %v899 = vpack.c.b16 %v873, %v872
    %v900 = vpack.c.b16 %v875, %v874
    %v901 = vpack.c.b16 %v877, %v876
    %v902 = vpack.c.b16 %v879, %v878
    %v903 = vpack.c.b16 %v881, %v880
    %v904 = vpack.c.b16 %v883, %v882
    %v905 = vpack.c.b16 %v885, %v884
    %v906 = vpack.c.b16 %v887, %v886
    %v907 = vpack.c.b16 %v889, %v888
    %v908 = vpack.c.b16 %v891, %v890
    %v909 = vpack.c.b16 %v893, %v892
    %926 = vmatpush.bf16.msra.mxu0 %v901
    %927 = vmatpush.bf16.msra.mxu0 %v900
    %928 = vmatpush.bf16.msra.mxu0 %v899
    %929 = vmatpush.bf16.msra.mxu0 %v898
    %930 = vmatpush.bf16.msra.mxu0 %v897
    %931 = vmatpush.bf16.msra.mxu0 %v896
    %932 = vmatpush.bf16.msra.mxu0 %v895
    %933 = vmatpush.bf16.msra.mxu0 %v894
    %934 = vmatmul.bf16.gmra.mxu0 %v792
    %v935 = vpop.f32.mrf.mxu0
    %v936 = vadd.f32 %v828, %v935
    %v937 = vpop.f32.mrf.mxu0
    %938 = vdwg.mxu0
    %939 = vmatpush.bf16.msra.mxu0 %v909
    %940 = vmatpush.bf16.msra.mxu0 %v908
    %941 = vmatpush.bf16.msra.mxu0 %v907
    %942 = vmatpush.bf16.msra.mxu0 %v906
    %943 = vmatpush.bf16.msra.mxu0 %v905
    %944 = vmatpush.bf16.msra.mxu0 %v904
    %945 = vmatpush.bf16.msra.mxu0 %v903
    %946 = vmatpush.bf16.msra.mxu0 %v902
    %947 = vmatmul.bf16.gmra.mxu0 %v793
    %v948 = vpop.f32.mrf.mxu0
    %v949 = vadd.f32 %v936, %v948
    %v950 = vpop.f32.mrf.mxu0
    %951 = vdwg.mxu0
    %v952 = vmax.f32 %v949, 0.0
    %v953 = vpack.c.bf16 %v952, %v952
    %v954 = vld [vmem:[#allocation11] sm:$0xf]
    %v955 = vld [vmem:[#allocation11 + $0x4] sm:$0xf]
    %v956 = vld [vmem:[#allocation11 + $0x8] sm:$0xf]
    %v957 = vld [vmem:[#allocation11 + $0xc] sm:$0xf]
    %v958 = vld [vmem:[#allocation11 + $0x10] sm:$0xf]
    %v959 = vld [vmem:[#allocation11 + $0x14] sm:$0xf]
    %v960 = vld [vmem:[#allocation11 + $0x18] sm:$0xf]
    %v961 = vld [vmem:[#allocation11 + $0x1c] sm:$0xf]
    %v962 = vld [vmem:[#allocation11 + $0x20] sm:$0xf]
    %v963 = vld [vmem:[#allocation11 + $0x24] sm:$0xf]
    %v964 = vld [vmem:[#allocation11 + $0x28] sm:$0xf]
    %v965 = vld [vmem:[#allocation11 + $0x2c] sm:$0xf]
    %v966 = vld [vmem:[#allocation11 + $0x30] sm:$0xf]
    %v967 = vld [vmem:[#allocation11 + $0x34] sm:$0xf]
    %v968 = vld [vmem:[#allocation11 + $0x38] sm:$0xf]
    %v969 = vld [vmem:[#allocation11 + $0x3c] sm:$0xf]
    %v970 = vld [vmem:[%s8] sm:$0x1]
    %v972 = vperm.slane %v970, 0
    %v990 = vunpack.c.l.b16 %v954
    %v991 = vunpack.c.l.b16 %v955
    %v992 = vunpack.c.l.b16 %v956
    %v993 = vunpack.c.l.b16 %v957
    %v994 = vunpack.c.l.b16 %v958
    %v995 = vunpack.c.l.b16 %v959
    %v996 = vunpack.c.l.b16 %v960
    %v997 = vunpack.c.l.b16 %v961
    %v998 = vunpack.c.l.b16 %v962
    %v999 = vunpack.c.l.b16 %v963
    %v1000 = vunpack.c.l.b16 %v964
    %v1001 = vunpack.c.l.b16 %v965
    %v1002 = vunpack.c.l.b16 %v966
    %v1003 = vunpack.c.l.b16 %v967
    %v1004 = vunpack.c.l.b16 %v968
    %v1005 = vunpack.c.l.b16 %v969
    %v1006 = vpack.c.b16 %v991, %v990
    %v1007 = vpack.c.b16 %v993, %v992
    %v1008 = vpack.c.b16 %v995, %v994
    %v1009 = vpack.c.b16 %v997, %v996
    %v1010 = vpack.c.b16 %v999, %v998
    %v1011 = vpack.c.b16 %v1001, %v1000
    %v1012 = vpack.c.b16 %v1003, %v1002
    %v1013 = vpack.c.b16 %v1005, %v1004
    %1022 = vmatpush.bf16.msra.mxu0 %v1013
    %1023 = vmatpush.bf16.msra.mxu0 %v1012
    %1024 = vmatpush.bf16.msra.mxu0 %v1011
    %1025 = vmatpush.bf16.msra.mxu0 %v1010
    %1026 = vmatpush.bf16.msra.mxu0 %v1009
    %1027 = vmatpush.bf16.msra.mxu0 %v1008
    %1028 = vmatpush.bf16.msra.mxu0 %v1007
    %1029 = vmatpush.bf16.msra.mxu0 %v1006
    %1030 = vmatmul.bf16.gmra.mxu0 %v953
    %v1031 = vpop.f32.mrf.mxu0
    %v1032 = vadd.f32 %v972, %v1031
    %v1033 = vpop.f32.mrf.mxu0
    %1034 = vdwg.mxu0
    %1035 = vst [vmem:[#allocation13] sm:$0xff] %v1032
    // Predicated region
    $region62: #{mlp_forward.1} parent=1 // pred_check
      _
    $region63: #{mlp_forward.1} parent=1 // pred_check_branch
      %1037 = sbr.rel (0) target = $region65
    $region64: #{mlp_forward.1} parent=1 // pred_region
      %1039 = vsyncadd [#allocation4], 0
      %s1041 = sshll.u32 [#allocation13], 4
      %s1042 = int_to_ptr.vmem [resolvable:$true] %s1041
      %s1043 = sshll.u32 %s9, 4
      %s1044 = int_to_ptr.hbm [resolvable:$true] %s1043
      %1046 = dma.vmem_to_hbm [thread:$0]  %s1042, 128, %s1044, [#allocation4]
    $region65: #{mlp_forward.1} parent=1 // pred_fallthru
      _
    // Predicated region
    $region66: #{mlp_forward.1} parent=1 // pred_check
      _
    $region67: #{mlp_forward.1} parent=1 // pred_check_branch
      %1048 = sbr.rel (0) target = $region69
    $region68: #{mlp_forward.1} parent=1 // pred_region
      %1050 = dma.done [#allocation4], 128
    $region69: #{mlp_forward.1} parent=1 // pred_fallthru
      _
    %1051 = vsyncpa [#allocation3], 1
    %1052 = vsyncpa [#allocation6], 1
    %1053 = vsyncpa [#allocation9], 1
    %1054 = vsyncpa [#allocation12], 1
    %1055 = vsyncpa [#allocation4], 1

</llo_original>
